<compile_context>
chip_gen: v7x
topology: tpu7x:2x2x1
jax: 0.10.0
libtpu: 0.0.40
codegen_flags: <defaults>
</compile_context>

<pallas_src>
import jax
import jax.numpy as jnp
from jax import lax
from jax.experimental import pallas as pl
from jax.experimental.pallas import tpu as pltpu

# Layer widths of the MLP: 2 -> 5 -> 5 -> 5 -> 5 -> 5 -> 1
_LAYER_DIMS = [(2, 5), (5, 5), (5, 5), (5, 5), (5, 5), (5, 1)]
_NUM_PARAMS = sum(i * o + o for i, o in _LAYER_DIMS)   # 141 floats total

_LANES = 128            # vreg lane width; batch points map onto lanes
_CHUNK_ROWS = 8         # sub-chunk = one f32 vreg (8 x 128) per live array
_MAX_BLOCK_ROWS = 1024  # sublane rows per grid step (1024*128 pts, 0.5 MiB/arr)
_MIN_GRID_STEPS = 8     # aim for >= 8 tiles: v7x megacore + pipeline depth


def _pinn_mlp_kernel(p_ref, xt_ref, out_ref):
    """Whole (tanh-refolded) MLP for one (block_rows, 128) tile of points.

    p_ref  : SMEM (141,) f32 -- refolded weights & biases, packed flat.
    xt_ref : VMEM (2, block_rows, 128) f32 -- stacked [x; t] coordinates.
    out_ref: VMEM (block_rows, 128) f32 -- u(x, t).
    """
    block_rows = out_ref.shape[0]
    n_chunks = block_rows // _CHUNK_ROWS

    def dense(h_list, in_dim, out_dim, off, act):
        # h_new[j] = act(sum_k h[k] * W[k, j] + b[j]); scalar weights read from
        # SMEM and broadcast against (8, 128) vregs on the VPU; tanh on the EUP.
        outs = []
        for j in range(out_dim):
            z = h_list[0] * p_ref[off + j]                        # k = 0
            for k in range(1, in_dim):
                z = z + h_list[k] * p_ref[off + k * out_dim + j]
            z = z + p_ref[off + in_dim * out_dim + j]             # bias b[j]
            outs.append(jnp.tanh(z) if act else z)
        return outs

    def chunk_body(c, carry):
        r = pl.multiple_of(c * _CHUNK_ROWS, _CHUNK_ROWS)
        x = xt_ref[0, pl.ds(r, _CHUNK_ROWS), :]
        t = xt_ref[1, pl.ds(r, _CHUNK_ROWS), :]
        h = [x, t]
        off = 0
        for li, (din, dout) in enumerate(_LAYER_DIMS):
            h = dense(h, din, dout, off, act=(li < len(_LAYER_DIMS) - 1))
            off += din * dout + dout
        out_ref[pl.ds(r, _CHUNK_ROWS), :] = h[0]   # lane-dense full-width store
        return carry

    unroll = 2 if (n_chunks % 2 == 0) else 1
    lax.fori_loop(0, n_chunks, chunk_body, None, unroll=unroll)


def _pack_params(params):
    """Pack all weights/biases into one flat f32 buffer, refolding the sigmoid.

    sigmoid(z) = 0.5 * tanh(z / 2) + 0.5, so with g_i = tanh(z_i / 2) the
    kernel computes g_i = tanh(h @ W'_i + b'_i) and the 0.5*g + 0.5 affine is
    folded into the *next* layer's packed weights:
      layer 1       : W' = W/2,  b' = b/2
      layers 2..5   : W' = W/4,  b' = b/2 + colsum(W)/4
      output layer 6: W' = W/2,  b' = b  + colsum(W)/2   (no activation after)
    """
    n_layers = len(params)
    flat = []
    for i, (w, b) in enumerate(params):
        w = jnp.asarray(w, jnp.float32)
        b = jnp.asarray(b, jnp.float32)
        colsum = jnp.sum(w, axis=0)
        if i == 0:
            w_p, b_p = 0.5 * w, 0.5 * b
        elif i < n_layers - 1:
            w_p, b_p = 0.25 * w, 0.5 * b + 0.25 * colsum
        else:
            w_p, b_p = 0.5 * w, b + 0.5 * colsum
        flat.append(w_p.reshape(-1))   # row-major: W'[k, j] at k*out + j
        flat.append(b_p.reshape(-1))
    packed = jnp.concatenate(flat)
    assert packed.shape == (_NUM_PARAMS,)
    return packed


def pinn_net_forward(x, t, params):
    """Pallas equivalent of Net.forward(x, t).

    x, t: [N, 1] float32.  Returns [N, 1] float32.
    params: list of (W, b) with W shape (in, out) and b shape (out,).
    """
    n = x.shape[0]
    packed = _pack_params(params)

    # ---- lay the batch out as (rows, 128): lane- and sublane-dense ----
    rows = -(-n // _LANES)
    # Pick block_rows so the grid has >= _MIN_GRID_STEPS steps when possible
    # (v7x megacore + pipelining), capped at _MAX_BLOCK_ROWS rows per step.
    target = -(-rows // _MIN_GRID_STEPS)
    target = -(-target // _CHUNK_ROWS) * _CHUNK_ROWS
    block_rows = max(_CHUNK_ROWS, min(_MAX_BLOCK_ROWS, target))
    rows_pad = -(-rows // block_rows) * block_rows
    n_pad = rows_pad * _LANES

    def to_tile(v):
        v = v.reshape(-1).astype(jnp.float32)
        if n_pad != n:                      # skip the extra HBM pass when divisible
            v = jnp.pad(v, (0, n_pad - n))
        return v.reshape(rows_pad, _LANES)

    xt = jnp.stack([to_tile(x), to_tile(t)])   # (2, rows_pad, 128): one DMA/step

    grid = (rows_pad // block_rows,)
    out = pl.pallas_call(
        _pinn_mlp_kernel,
        out_shape=jax.ShapeDtypeStruct((rows_pad, _LANES), jnp.float32),
        grid_spec=pltpu.PrefetchScalarGridSpec(
            num_scalar_prefetch=1,          # packed params -> SMEM, once
            grid=grid,
            in_specs=[
                pl.BlockSpec((2, block_rows, _LANES), lambda i, p: (0, i, 0)),
            ],
            out_specs=pl.BlockSpec((block_rows, _LANES), lambda i, p: (i, 0)),
        ),
        compiler_params=pltpu.CompilerParams(
            dimension_semantics=("parallel",),   # shards tiles across TCs on v7x
        ),
    )(packed, xt)

    return out.reshape(-1)[:n].reshape(n, 1)


def init_params(key):
    """PyTorch nn.Linear default init: U(-1/sqrt(fan_in), 1/sqrt(fan_in))."""
    params = []
    for fan_in, fan_out in _LAYER_DIMS:
        key, kw, kb = jax.random.split(key, 3)
        bound = 1.0 / (fan_in ** 0.5)
        w = jax.random.uniform(kw, (fan_in, fan_out), jnp.float32, -bound, bound)
        b = jax.random.uniform(kb, (fan_out,), jnp.float32, -bound, bound)
        params.append((w, b))
    return params


def reference_forward(x, t, params):
    """Plain-JAX reference matching Net.forward (exact sigmoid, f32 matmuls)."""
    h = jnp.concatenate([x, t], axis=1)
    for i, (w, b) in enumerate(params):
        h = jnp.dot(h, w, precision=lax.Precision.HIGHEST) + b
        if i < len(params) - 1:
            h = jax.nn.sigmoid(h)
    return h


if __name__ == "__main__":
    key = jax.random.PRNGKey(0)
    kx, kt, kp = jax.random.split(key, 3)
    params = init_params(kp)

    # Small batch of (x, t) collocation points (matches the PINN toy usage).
    N = 8
    x = jax.random.uniform(kx, (N, 1), jnp.float32)
    t = jax.random.uniform(kt, (N, 1), jnp.float32)

    out = jax.block_until_ready(pinn_net_forward(x, t, params))
    ref = reference_forward(x, t, params)
    assert out.shape == (N, 1)
    assert jnp.allclose(out, ref, atol=1e-4, rtol=1e-4), (out, ref)

    # A second, ragged batch that exercises padding, a multi-step grid and the
    # multi-chunk inner loop (rows=70 -> block_rows=16, grid=(5,), 2 chunks).
    N2 = 8960 - 3
    x2 = jax.random.uniform(kx, (N2, 1), jnp.float32)
    t2 = jax.random.uniform(kt, (N2, 1), jnp.float32)
    out2 = jax.block_until_ready(pinn_net_forward(x2, t2, params))
    ref2 = reference_forward(x2, t2, params)
    assert out2.shape == (N2, 1)
    assert jnp.allclose(out2, ref2, atol=1e-4, rtol=1e-4)

    print("KERNEL_OK")
</pallas_src>

<mosaic_0001>
module attributes {stable_mosaic.version = 11 : i64} {
  func.func @_pinn_mlp_kernel(%arg0: i32, %arg1: memref<141xf32, #tpu.memory_space<smem>>, %arg2: memref<2x8x128xf32, #tpu.memory_space<vmem>>, %arg3: memref<8x128xf32, #tpu.memory_space<vmem>>) attributes {dimension_semantics = [#tpu.dimension_semantics<parallel>], iteration_bounds = array<i64: 1>, scalar_prefetch = 1 : i64, scratch_operands = 0 : i64, tpu.core_type = #tpu.core_type<tc>, window_params = [{transform_indices = @transform_0, window_bounds = array<i64: 2, 8, 128>}, {transform_indices = @transform_1, window_bounds = array<i64: 8, 128>}]} {
    %c0_i32 = arith.constant 0 : i32
    %c8_i32 = arith.constant 8 : i32
    %0 = arith.muli %c0_i32, %c8_i32 : i32
    %1 = tpu.assume_multiple %0, 8 : i32
    %c0 = arith.constant 0 : index
    %2 = arith.index_cast %1 : i32 to index
    %c0_0 = arith.constant 0 : index
    %3 = vector.load %arg2[%c0, %2, %c0_0] : memref<2x8x128xf32, #tpu.memory_space<vmem>>, vector<1x8x128xf32>
    %4 = vector.shape_cast %3 : vector<1x8x128xf32> to vector<8x128xf32>
    %c1 = arith.constant 1 : index
    %5 = arith.index_cast %1 : i32 to index
    %c0_1 = arith.constant 0 : index
    %6 = vector.load %arg2[%c1, %5, %c0_1] : memref<2x8x128xf32, #tpu.memory_space<vmem>>, vector<1x8x128xf32>
    %7 = vector.shape_cast %6 : vector<1x8x128xf32> to vector<8x128xf32>
    %c0_2 = arith.constant 0 : index
    %8 = memref.load %arg1[%c0_2] : memref<141xf32, #tpu.memory_space<smem>>
    %9 = vector.broadcast %8 : f32 to vector<8x128xf32>
    %10 = arith.mulf %4, %9 : vector<8x128xf32>
    %c5 = arith.constant 5 : index
    %11 = memref.load %arg1[%c5] : memref<141xf32, #tpu.memory_space<smem>>
    %12 = vector.broadcast %11 : f32 to vector<8x128xf32>
    %13 = arith.mulf %7, %12 : vector<8x128xf32>
    %14 = arith.addf %10, %13 : vector<8x128xf32>
    %c10 = arith.constant 10 : index
    %15 = memref.load %arg1[%c10] : memref<141xf32, #tpu.memory_space<smem>>
    %16 = vector.broadcast %15 : f32 to vector<8x128xf32>
    %17 = arith.addf %14, %16 : vector<8x128xf32>
    %18 = math.tanh %17 : vector<8x128xf32>
    %c1_3 = arith.constant 1 : index
    %19 = memref.load %arg1[%c1_3] : memref<141xf32, #tpu.memory_space<smem>>
    %20 = vector.broadcast %19 : f32 to vector<8x128xf32>
    %21 = arith.mulf %4, %20 : vector<8x128xf32>
    %c6 = arith.constant 6 : index
    %22 = memref.load %arg1[%c6] : memref<141xf32, #tpu.memory_space<smem>>
    %23 = vector.broadcast %22 : f32 to vector<8x128xf32>
    %24 = arith.mulf %7, %23 : vector<8x128xf32>
    %25 = arith.addf %21, %24 : vector<8x128xf32>
    %c11 = arith.constant 11 : index
    %26 = memref.load %arg1[%c11] : memref<141xf32, #tpu.memory_space<smem>>
    %27 = vector.broadcast %26 : f32 to vector<8x128xf32>
    %28 = arith.addf %25, %27 : vector<8x128xf32>
    %29 = math.tanh %28 : vector<8x128xf32>
    %c2 = arith.constant 2 : index
    %30 = memref.load %arg1[%c2] : memref<141xf32, #tpu.memory_space<smem>>
    %31 = vector.broadcast %30 : f32 to vector<8x128xf32>
    %32 = arith.mulf %4, %31 : vector<8x128xf32>
    %c7 = arith.constant 7 : index
    %33 = memref.load %arg1[%c7] : memref<141xf32, #tpu.memory_space<smem>>
    %34 = vector.broadcast %33 : f32 to vector<8x128xf32>
    %35 = arith.mulf %7, %34 : vector<8x128xf32>
    %36 = arith.addf %32, %35 : vector<8x128xf32>
    %c12 = arith.constant 12 : index
    %37 = memref.load %arg1[%c12] : memref<141xf32, #tpu.memory_space<smem>>
    %38 = vector.broadcast %37 : f32 to vector<8x128xf32>
    %39 = arith.addf %36, %38 : vector<8x128xf32>
    %40 = math.tanh %39 : vector<8x128xf32>
    %c3 = arith.constant 3 : index
    %41 = memref.load %arg1[%c3] : memref<141xf32, #tpu.memory_space<smem>>
    %42 = vector.broadcast %41 : f32 to vector<8x128xf32>
    %43 = arith.mulf %4, %42 : vector<8x128xf32>
    %c8 = arith.constant 8 : index
    %44 = memref.load %arg1[%c8] : memref<141xf32, #tpu.memory_space<smem>>
    %45 = vector.broadcast %44 : f32 to vector<8x128xf32>
    %46 = arith.mulf %7, %45 : vector<8x128xf32>
    %47 = arith.addf %43, %46 : vector<8x128xf32>
    %c13 = arith.constant 13 : index
    %48 = memref.load %arg1[%c13] : memref<141xf32, #tpu.memory_space<smem>>
    %49 = vector.broadcast %48 : f32 to vector<8x128xf32>
    %50 = arith.addf %47, %49 : vector<8x128xf32>
    %51 = math.tanh %50 : vector<8x128xf32>
    %c4 = arith.constant 4 : index
    %52 = memref.load %arg1[%c4] : memref<141xf32, #tpu.memory_space<smem>>
    %53 = vector.broadcast %52 : f32 to vector<8x128xf32>
    %54 = arith.mulf %4, %53 : vector<8x128xf32>
    %c9 = arith.constant 9 : index
    %55 = memref.load %arg1[%c9] : memref<141xf32, #tpu.memory_space<smem>>
    %56 = vector.broadcast %55 : f32 to vector<8x128xf32>
    %57 = arith.mulf %7, %56 : vector<8x128xf32>
    %58 = arith.addf %54, %57 : vector<8x128xf32>
    %c14 = arith.constant 14 : index
    %59 = memref.load %arg1[%c14] : memref<141xf32, #tpu.memory_space<smem>>
    %60 = vector.broadcast %59 : f32 to vector<8x128xf32>
    %61 = arith.addf %58, %60 : vector<8x128xf32>
    %62 = math.tanh %61 : vector<8x128xf32>
    %c15 = arith.constant 15 : index
    %63 = memref.load %arg1[%c15] : memref<141xf32, #tpu.memory_space<smem>>
    %64 = vector.broadcast %63 : f32 to vector<8x128xf32>
    %65 = arith.mulf %18, %64 : vector<8x128xf32>
    %c20 = arith.constant 20 : index
    %66 = memref.load %arg1[%c20] : memref<141xf32, #tpu.memory_space<smem>>
    %67 = vector.broadcast %66 : f32 to vector<8x128xf32>
    %68 = arith.mulf %29, %67 : vector<8x128xf32>
    %69 = arith.addf %65, %68 : vector<8x128xf32>
    %c25 = arith.constant 25 : index
    %70 = memref.load %arg1[%c25] : memref<141xf32, #tpu.memory_space<smem>>
    %71 = vector.broadcast %70 : f32 to vector<8x128xf32>
    %72 = arith.mulf %40, %71 : vector<8x128xf32>
    %73 = arith.addf %69, %72 : vector<8x128xf32>
    %c30 = arith.constant 30 : index
    %74 = memref.load %arg1[%c30] : memref<141xf32, #tpu.memory_space<smem>>
    %75 = vector.broadcast %74 : f32 to vector<8x128xf32>
    %76 = arith.mulf %51, %75 : vector<8x128xf32>
    %77 = arith.addf %73, %76 : vector<8x128xf32>
    %c35 = arith.constant 35 : index
    %78 = memref.load %arg1[%c35] : memref<141xf32, #tpu.memory_space<smem>>
    %79 = vector.broadcast %78 : f32 to vector<8x128xf32>
    %80 = arith.mulf %62, %79 : vector<8x128xf32>
    %81 = arith.addf %77, %80 : vector<8x128xf32>
    %c40 = arith.constant 40 : index
    %82 = memref.load %arg1[%c40] : memref<141xf32, #tpu.memory_space<smem>>
    %83 = vector.broadcast %82 : f32 to vector<8x128xf32>
    %84 = arith.addf %81, %83 : vector<8x128xf32>
    %85 = math.tanh %84 : vector<8x128xf32>
    %c16 = arith.constant 16 : index
    %86 = memref.load %arg1[%c16] : memref<141xf32, #tpu.memory_space<smem>>
    %87 = vector.broadcast %86 : f32 to vector<8x128xf32>
    %88 = arith.mulf %18, %87 : vector<8x128xf32>
    %c21 = arith.constant 21 : index
    %89 = memref.load %arg1[%c21] : memref<141xf32, #tpu.memory_space<smem>>
    %90 = vector.broadcast %89 : f32 to vector<8x128xf32>
    %91 = arith.mulf %29, %90 : vector<8x128xf32>
    %92 = arith.addf %88, %91 : vector<8x128xf32>
    %c26 = arith.constant 26 : index
    %93 = memref.load %arg1[%c26] : memref<141xf32, #tpu.memory_space<smem>>
    %94 = vector.broadcast %93 : f32 to vector<8x128xf32>
    %95 = arith.mulf %40, %94 : vector<8x128xf32>
    %96 = arith.addf %92, %95 : vector<8x128xf32>
    %c31 = arith.constant 31 : index
    %97 = memref.load %arg1[%c31] : memref<141xf32, #tpu.memory_space<smem>>
    %98 = vector.broadcast %97 : f32 to vector<8x128xf32>
    %99 = arith.mulf %51, %98 : vector<8x128xf32>
    %100 = arith.addf %96, %99 : vector<8x128xf32>
    %c36 = arith.constant 36 : index
    %101 = memref.load %arg1[%c36] : memref<141xf32, #tpu.memory_space<smem>>
    %102 = vector.broadcast %101 : f32 to vector<8x128xf32>
    %103 = arith.mulf %62, %102 : vector<8x128xf32>
    %104 = arith.addf %100, %103 : vector<8x128xf32>
    %c41 = arith.constant 41 : index
    %105 = memref.load %arg1[%c41] : memref<141xf32, #tpu.memory_space<smem>>
    %106 = vector.broadcast %105 : f32 to vector<8x128xf32>
    %107 = arith.addf %104, %106 : vector<8x128xf32>
    %108 = math.tanh %107 : vector<8x128xf32>
    %c17 = arith.constant 17 : index
    %109 = memref.load %arg1[%c17] : memref<141xf32, #tpu.memory_space<smem>>
    %110 = vector.broadcast %109 : f32 to vector<8x128xf32>
    %111 = arith.mulf %18, %110 : vector<8x128xf32>
    %c22 = arith.constant 22 : index
    %112 = memref.load %arg1[%c22] : memref<141xf32, #tpu.memory_space<smem>>
    %113 = vector.broadcast %112 : f32 to vector<8x128xf32>
    %114 = arith.mulf %29, %113 : vector<8x128xf32>
    %115 = arith.addf %111, %114 : vector<8x128xf32>
    %c27 = arith.constant 27 : index
    %116 = memref.load %arg1[%c27] : memref<141xf32, #tpu.memory_space<smem>>
    %117 = vector.broadcast %116 : f32 to vector<8x128xf32>
    %118 = arith.mulf %40, %117 : vector<8x128xf32>
    %119 = arith.addf %115, %118 : vector<8x128xf32>
    %c32 = arith.constant 32 : index
    %120 = memref.load %arg1[%c32] : memref<141xf32, #tpu.memory_space<smem>>
    %121 = vector.broadcast %120 : f32 to vector<8x128xf32>
    %122 = arith.mulf %51, %121 : vector<8x128xf32>
    %123 = arith.addf %119, %122 : vector<8x128xf32>
    %c37 = arith.constant 37 : index
    %124 = memref.load %arg1[%c37] : memref<141xf32, #tpu.memory_space<smem>>
    %125 = vector.broadcast %124 : f32 to vector<8x128xf32>
    %126 = arith.mulf %62, %125 : vector<8x128xf32>
    %127 = arith.addf %123, %126 : vector<8x128xf32>
    %c42 = arith.constant 42 : index
    %128 = memref.load %arg1[%c42] : memref<141xf32, #tpu.memory_space<smem>>
    %129 = vector.broadcast %128 : f32 to vector<8x128xf32>
    %130 = arith.addf %127, %129 : vector<8x128xf32>
    %131 = math.tanh %130 : vector<8x128xf32>
    %c18 = arith.constant 18 : index
    %132 = memref.load %arg1[%c18] : memref<141xf32, #tpu.memory_space<smem>>
    %133 = vector.broadcast %132 : f32 to vector<8x128xf32>
    %134 = arith.mulf %18, %133 : vector<8x128xf32>
    %c23 = arith.constant 23 : index
    %135 = memref.load %arg1[%c23] : memref<141xf32, #tpu.memory_space<smem>>
    %136 = vector.broadcast %135 : f32 to vector<8x128xf32>
    %137 = arith.mulf %29, %136 : vector<8x128xf32>
    %138 = arith.addf %134, %137 : vector<8x128xf32>
    %c28 = arith.constant 28 : index
    %139 = memref.load %arg1[%c28] : memref<141xf32, #tpu.memory_space<smem>>
    %140 = vector.broadcast %139 : f32 to vector<8x128xf32>
    %141 = arith.mulf %40, %140 : vector<8x128xf32>
    %142 = arith.addf %138, %141 : vector<8x128xf32>
    %c33 = arith.constant 33 : index
    %143 = memref.load %arg1[%c33] : memref<141xf32, #tpu.memory_space<smem>>
    %144 = vector.broadcast %143 : f32 to vector<8x128xf32>
    %145 = arith.mulf %51, %144 : vector<8x128xf32>
    %146 = arith.addf %142, %145 : vector<8x128xf32>
    %c38 = arith.constant 38 : index
    %147 = memref.load %arg1[%c38] : memref<141xf32, #tpu.memory_space<smem>>
    %148 = vector.broadcast %147 : f32 to vector<8x128xf32>
    %149 = arith.mulf %62, %148 : vector<8x128xf32>
    %150 = arith.addf %146, %149 : vector<8x128xf32>
    %c43 = arith.constant 43 : index
    %151 = memref.load %arg1[%c43] : memref<141xf32, #tpu.memory_space<smem>>
    %152 = vector.broadcast %151 : f32 to vector<8x128xf32>
    %153 = arith.addf %150, %152 : vector<8x128xf32>
    %154 = math.tanh %153 : vector<8x128xf32>
    %c19 = arith.constant 19 : index
    %155 = memref.load %arg1[%c19] : memref<141xf32, #tpu.memory_space<smem>>
    %156 = vector.broadcast %155 : f32 to vector<8x128xf32>
    %157 = arith.mulf %18, %156 : vector<8x128xf32>
    %c24 = arith.constant 24 : index
    %158 = memref.load %arg1[%c24] : memref<141xf32, #tpu.memory_space<smem>>
    %159 = vector.broadcast %158 : f32 to vector<8x128xf32>
    %160 = arith.mulf %29, %159 : vector<8x128xf32>
    %161 = arith.addf %157, %160 : vector<8x128xf32>
    %c29 = arith.constant 29 : index
    %162 = memref.load %arg1[%c29] : memref<141xf32, #tpu.memory_space<smem>>
    %163 = vector.broadcast %162 : f32 to vector<8x128xf32>
    %164 = arith.mulf %40, %163 : vector<8x128xf32>
    %165 = arith.addf %161, %164 : vector<8x128xf32>
    %c34 = arith.constant 34 : index
    %166 = memref.load %arg1[%c34] : memref<141xf32, #tpu.memory_space<smem>>
    %167 = vector.broadcast %166 : f32 to vector<8x128xf32>
    %168 = arith.mulf %51, %167 : vector<8x128xf32>
    %169 = arith.addf %165, %168 : vector<8x128xf32>
    %c39 = arith.constant 39 : index
    %170 = memref.load %arg1[%c39] : memref<141xf32, #tpu.memory_space<smem>>
    %171 = vector.broadcast %170 : f32 to vector<8x128xf32>
    %172 = arith.mulf %62, %171 : vector<8x128xf32>
    %173 = arith.addf %169, %172 : vector<8x128xf32>
    %c44 = arith.constant 44 : index
    %174 = memref.load %arg1[%c44] : memref<141xf32, #tpu.memory_space<smem>>
    %175 = vector.broadcast %174 : f32 to vector<8x128xf32>
    %176 = arith.addf %173, %175 : vector<8x128xf32>
    %177 = math.tanh %176 : vector<8x128xf32>
    %c45 = arith.constant 45 : index
    %178 = memref.load %arg1[%c45] : memref<141xf32, #tpu.memory_space<smem>>
    %179 = vector.broadcast %178 : f32 to vector<8x128xf32>
    %180 = arith.mulf %85, %179 : vector<8x128xf32>
    %c50 = arith.constant 50 : index
    %181 = memref.load %arg1[%c50] : memref<141xf32, #tpu.memory_space<smem>>
    %182 = vector.broadcast %181 : f32 to vector<8x128xf32>
    %183 = arith.mulf %108, %182 : vector<8x128xf32>
    %184 = arith.addf %180, %183 : vector<8x128xf32>
    %c55 = arith.constant 55 : index
    %185 = memref.load %arg1[%c55] : memref<141xf32, #tpu.memory_space<smem>>
    %186 = vector.broadcast %185 : f32 to vector<8x128xf32>
    %187 = arith.mulf %131, %186 : vector<8x128xf32>
    %188 = arith.addf %184, %187 : vector<8x128xf32>
    %c60 = arith.constant 60 : index
    %189 = memref.load %arg1[%c60] : memref<141xf32, #tpu.memory_space<smem>>
    %190 = vector.broadcast %189 : f32 to vector<8x128xf32>
    %191 = arith.mulf %154, %190 : vector<8x128xf32>
    %192 = arith.addf %188, %191 : vector<8x128xf32>
    %c65 = arith.constant 65 : index
    %193 = memref.load %arg1[%c65] : memref<141xf32, #tpu.memory_space<smem>>
    %194 = vector.broadcast %193 : f32 to vector<8x128xf32>
    %195 = arith.mulf %177, %194 : vector<8x128xf32>
    %196 = arith.addf %192, %195 : vector<8x128xf32>
    %c70 = arith.constant 70 : index
    %197 = memref.load %arg1[%c70] : memref<141xf32, #tpu.memory_space<smem>>
    %198 = vector.broadcast %197 : f32 to vector<8x128xf32>
    %199 = arith.addf %196, %198 : vector<8x128xf32>
    %200 = math.tanh %199 : vector<8x128xf32>
    %c46 = arith.constant 46 : index
    %201 = memref.load %arg1[%c46] : memref<141xf32, #tpu.memory_space<smem>>
    %202 = vector.broadcast %201 : f32 to vector<8x128xf32>
    %203 = arith.mulf %85, %202 : vector<8x128xf32>
    %c51 = arith.constant 51 : index
    %204 = memref.load %arg1[%c51] : memref<141xf32, #tpu.memory_space<smem>>
    %205 = vector.broadcast %204 : f32 to vector<8x128xf32>
    %206 = arith.mulf %108, %205 : vector<8x128xf32>
    %207 = arith.addf %203, %206 : vector<8x128xf32>
    %c56 = arith.constant 56 : index
    %208 = memref.load %arg1[%c56] : memref<141xf32, #tpu.memory_space<smem>>
    %209 = vector.broadcast %208 : f32 to vector<8x128xf32>
    %210 = arith.mulf %131, %209 : vector<8x128xf32>
    %211 = arith.addf %207, %210 : vector<8x128xf32>
    %c61 = arith.constant 61 : index
    %212 = memref.load %arg1[%c61] : memref<141xf32, #tpu.memory_space<smem>>
    %213 = vector.broadcast %212 : f32 to vector<8x128xf32>
    %214 = arith.mulf %154, %213 : vector<8x128xf32>
    %215 = arith.addf %211, %214 : vector<8x128xf32>
    %c66 = arith.constant 66 : index
    %216 = memref.load %arg1[%c66] : memref<141xf32, #tpu.memory_space<smem>>
    %217 = vector.broadcast %216 : f32 to vector<8x128xf32>
    %218 = arith.mulf %177, %217 : vector<8x128xf32>
    %219 = arith.addf %215, %218 : vector<8x128xf32>
    %c71 = arith.constant 71 : index
    %220 = memref.load %arg1[%c71] : memref<141xf32, #tpu.memory_space<smem>>
    %221 = vector.broadcast %220 : f32 to vector<8x128xf32>
    %222 = arith.addf %219, %221 : vector<8x128xf32>
    %223 = math.tanh %222 : vector<8x128xf32>
    %c47 = arith.constant 47 : index
    %224 = memref.load %arg1[%c47] : memref<141xf32, #tpu.memory_space<smem>>
    %225 = vector.broadcast %224 : f32 to vector<8x128xf32>
    %226 = arith.mulf %85, %225 : vector<8x128xf32>
    %c52 = arith.constant 52 : index
    %227 = memref.load %arg1[%c52] : memref<141xf32, #tpu.memory_space<smem>>
    %228 = vector.broadcast %227 : f32 to vector<8x128xf32>
    %229 = arith.mulf %108, %228 : vector<8x128xf32>
    %230 = arith.addf %226, %229 : vector<8x128xf32>
    %c57 = arith.constant 57 : index
    %231 = memref.load %arg1[%c57] : memref<141xf32, #tpu.memory_space<smem>>
    %232 = vector.broadcast %231 : f32 to vector<8x128xf32>
    %233 = arith.mulf %131, %232 : vector<8x128xf32>
    %234 = arith.addf %230, %233 : vector<8x128xf32>
    %c62 = arith.constant 62 : index
    %235 = memref.load %arg1[%c62] : memref<141xf32, #tpu.memory_space<smem>>
    %236 = vector.broadcast %235 : f32 to vector<8x128xf32>
    %237 = arith.mulf %154, %236 : vector<8x128xf32>
    %238 = arith.addf %234, %237 : vector<8x128xf32>
    %c67 = arith.constant 67 : index
    %239 = memref.load %arg1[%c67] : memref<141xf32, #tpu.memory_space<smem>>
    %240 = vector.broadcast %239 : f32 to vector<8x128xf32>
    %241 = arith.mulf %177, %240 : vector<8x128xf32>
    %242 = arith.addf %238, %241 : vector<8x128xf32>
    %c72 = arith.constant 72 : index
    %243 = memref.load %arg1[%c72] : memref<141xf32, #tpu.memory_space<smem>>
    %244 = vector.broadcast %243 : f32 to vector<8x128xf32>
    %245 = arith.addf %242, %244 : vector<8x128xf32>
    %246 = math.tanh %245 : vector<8x128xf32>
    %c48 = arith.constant 48 : index
    %247 = memref.load %arg1[%c48] : memref<141xf32, #tpu.memory_space<smem>>
    %248 = vector.broadcast %247 : f32 to vector<8x128xf32>
    %249 = arith.mulf %85, %248 : vector<8x128xf32>
    %c53 = arith.constant 53 : index
    %250 = memref.load %arg1[%c53] : memref<141xf32, #tpu.memory_space<smem>>
    %251 = vector.broadcast %250 : f32 to vector<8x128xf32>
    %252 = arith.mulf %108, %251 : vector<8x128xf32>
    %253 = arith.addf %249, %252 : vector<8x128xf32>
    %c58 = arith.constant 58 : index
    %254 = memref.load %arg1[%c58] : memref<141xf32, #tpu.memory_space<smem>>
    %255 = vector.broadcast %254 : f32 to vector<8x128xf32>
    %256 = arith.mulf %131, %255 : vector<8x128xf32>
    %257 = arith.addf %253, %256 : vector<8x128xf32>
    %c63 = arith.constant 63 : index
    %258 = memref.load %arg1[%c63] : memref<141xf32, #tpu.memory_space<smem>>
    %259 = vector.broadcast %258 : f32 to vector<8x128xf32>
    %260 = arith.mulf %154, %259 : vector<8x128xf32>
    %261 = arith.addf %257, %260 : vector<8x128xf32>
    %c68 = arith.constant 68 : index
    %262 = memref.load %arg1[%c68] : memref<141xf32, #tpu.memory_space<smem>>
    %263 = vector.broadcast %262 : f32 to vector<8x128xf32>
    %264 = arith.mulf %177, %263 : vector<8x128xf32>
    %265 = arith.addf %261, %264 : vector<8x128xf32>
    %c73 = arith.constant 73 : index
    %266 = memref.load %arg1[%c73] : memref<141xf32, #tpu.memory_space<smem>>
    %267 = vector.broadcast %266 : f32 to vector<8x128xf32>
    %268 = arith.addf %265, %267 : vector<8x128xf32>
    %269 = math.tanh %268 : vector<8x128xf32>
    %c49 = arith.constant 49 : index
    %270 = memref.load %arg1[%c49] : memref<141xf32, #tpu.memory_space<smem>>
    %271 = vector.broadcast %270 : f32 to vector<8x128xf32>
    %272 = arith.mulf %85, %271 : vector<8x128xf32>
    %c54 = arith.constant 54 : index
    %273 = memref.load %arg1[%c54] : memref<141xf32, #tpu.memory_space<smem>>
    %274 = vector.broadcast %273 : f32 to vector<8x128xf32>
    %275 = arith.mulf %108, %274 : vector<8x128xf32>
    %276 = arith.addf %272, %275 : vector<8x128xf32>
    %c59 = arith.constant 59 : index
    %277 = memref.load %arg1[%c59] : memref<141xf32, #tpu.memory_space<smem>>
    %278 = vector.broadcast %277 : f32 to vector<8x128xf32>
    %279 = arith.mulf %131, %278 : vector<8x128xf32>
    %280 = arith.addf %276, %279 : vector<8x128xf32>
    %c64 = arith.constant 64 : index
    %281 = memref.load %arg1[%c64] : memref<141xf32, #tpu.memory_space<smem>>
    %282 = vector.broadcast %281 : f32 to vector<8x128xf32>
    %283 = arith.mulf %154, %282 : vector<8x128xf32>
    %284 = arith.addf %280, %283 : vector<8x128xf32>
    %c69 = arith.constant 69 : index
    %285 = memref.load %arg1[%c69] : memref<141xf32, #tpu.memory_space<smem>>
    %286 = vector.broadcast %285 : f32 to vector<8x128xf32>
    %287 = arith.mulf %177, %286 : vector<8x128xf32>
    %288 = arith.addf %284, %287 : vector<8x128xf32>
    %c74 = arith.constant 74 : index
    %289 = memref.load %arg1[%c74] : memref<141xf32, #tpu.memory_space<smem>>
    %290 = vector.broadcast %289 : f32 to vector<8x128xf32>
    %291 = arith.addf %288, %290 : vector<8x128xf32>
    %292 = math.tanh %291 : vector<8x128xf32>
    %c75 = arith.constant 75 : index
    %293 = memref.load %arg1[%c75] : memref<141xf32, #tpu.memory_space<smem>>
    %294 = vector.broadcast %293 : f32 to vector<8x128xf32>
    %295 = arith.mulf %200, %294 : vector<8x128xf32>
    %c80 = arith.constant 80 : index
    %296 = memref.load %arg1[%c80] : memref<141xf32, #tpu.memory_space<smem>>
    %297 = vector.broadcast %296 : f32 to vector<8x128xf32>
    %298 = arith.mulf %223, %297 : vector<8x128xf32>
    %299 = arith.addf %295, %298 : vector<8x128xf32>
    %c85 = arith.constant 85 : index
    %300 = memref.load %arg1[%c85] : memref<141xf32, #tpu.memory_space<smem>>
    %301 = vector.broadcast %300 : f32 to vector<8x128xf32>
    %302 = arith.mulf %246, %301 : vector<8x128xf32>
    %303 = arith.addf %299, %302 : vector<8x128xf32>
    %c90 = arith.constant 90 : index
    %304 = memref.load %arg1[%c90] : memref<141xf32, #tpu.memory_space<smem>>
    %305 = vector.broadcast %304 : f32 to vector<8x128xf32>
    %306 = arith.mulf %269, %305 : vector<8x128xf32>
    %307 = arith.addf %303, %306 : vector<8x128xf32>
    %c95 = arith.constant 95 : index
    %308 = memref.load %arg1[%c95] : memref<141xf32, #tpu.memory_space<smem>>
    %309 = vector.broadcast %308 : f32 to vector<8x128xf32>
    %310 = arith.mulf %292, %309 : vector<8x128xf32>
    %311 = arith.addf %307, %310 : vector<8x128xf32>
    %c100 = arith.constant 100 : index
    %312 = memref.load %arg1[%c100] : memref<141xf32, #tpu.memory_space<smem>>
    %313 = vector.broadcast %312 : f32 to vector<8x128xf32>
    %314 = arith.addf %311, %313 : vector<8x128xf32>
    %315 = math.tanh %314 : vector<8x128xf32>
    %c76 = arith.constant 76 : index
    %316 = memref.load %arg1[%c76] : memref<141xf32, #tpu.memory_space<smem>>
    %317 = vector.broadcast %316 : f32 to vector<8x128xf32>
    %318 = arith.mulf %200, %317 : vector<8x128xf32>
    %c81 = arith.constant 81 : index
    %319 = memref.load %arg1[%c81] : memref<141xf32, #tpu.memory_space<smem>>
    %320 = vector.broadcast %319 : f32 to vector<8x128xf32>
    %321 = arith.mulf %223, %320 : vector<8x128xf32>
    %322 = arith.addf %318, %321 : vector<8x128xf32>
    %c86 = arith.constant 86 : index
    %323 = memref.load %arg1[%c86] : memref<141xf32, #tpu.memory_space<smem>>
    %324 = vector.broadcast %323 : f32 to vector<8x128xf32>
    %325 = arith.mulf %246, %324 : vector<8x128xf32>
    %326 = arith.addf %322, %325 : vector<8x128xf32>
    %c91 = arith.constant 91 : index
    %327 = memref.load %arg1[%c91] : memref<141xf32, #tpu.memory_space<smem>>
    %328 = vector.broadcast %327 : f32 to vector<8x128xf32>
    %329 = arith.mulf %269, %328 : vector<8x128xf32>
    %330 = arith.addf %326, %329 : vector<8x128xf32>
    %c96 = arith.constant 96 : index
    %331 = memref.load %arg1[%c96] : memref<141xf32, #tpu.memory_space<smem>>
    %332 = vector.broadcast %331 : f32 to vector<8x128xf32>
    %333 = arith.mulf %292, %332 : vector<8x128xf32>
    %334 = arith.addf %330, %333 : vector<8x128xf32>
    %c101 = arith.constant 101 : index
    %335 = memref.load %arg1[%c101] : memref<141xf32, #tpu.memory_space<smem>>
    %336 = vector.broadcast %335 : f32 to vector<8x128xf32>
    %337 = arith.addf %334, %336 : vector<8x128xf32>
    %338 = math.tanh %337 : vector<8x128xf32>
    %c77 = arith.constant 77 : index
    %339 = memref.load %arg1[%c77] : memref<141xf32, #tpu.memory_space<smem>>
    %340 = vector.broadcast %339 : f32 to vector<8x128xf32>
    %341 = arith.mulf %200, %340 : vector<8x128xf32>
    %c82 = arith.constant 82 : index
    %342 = memref.load %arg1[%c82] : memref<141xf32, #tpu.memory_space<smem>>
    %343 = vector.broadcast %342 : f32 to vector<8x128xf32>
    %344 = arith.mulf %223, %343 : vector<8x128xf32>
    %345 = arith.addf %341, %344 : vector<8x128xf32>
    %c87 = arith.constant 87 : index
    %346 = memref.load %arg1[%c87] : memref<141xf32, #tpu.memory_space<smem>>
    %347 = vector.broadcast %346 : f32 to vector<8x128xf32>
    %348 = arith.mulf %246, %347 : vector<8x128xf32>
    %349 = arith.addf %345, %348 : vector<8x128xf32>
    %c92 = arith.constant 92 : index
    %350 = memref.load %arg1[%c92] : memref<141xf32, #tpu.memory_space<smem>>
    %351 = vector.broadcast %350 : f32 to vector<8x128xf32>
    %352 = arith.mulf %269, %351 : vector<8x128xf32>
    %353 = arith.addf %349, %352 : vector<8x128xf32>
    %c97 = arith.constant 97 : index
    %354 = memref.load %arg1[%c97] : memref<141xf32, #tpu.memory_space<smem>>
    %355 = vector.broadcast %354 : f32 to vector<8x128xf32>
    %356 = arith.mulf %292, %355 : vector<8x128xf32>
    %357 = arith.addf %353, %356 : vector<8x128xf32>
    %c102 = arith.constant 102 : index
    %358 = memref.load %arg1[%c102] : memref<141xf32, #tpu.memory_space<smem>>
    %359 = vector.broadcast %358 : f32 to vector<8x128xf32>
    %360 = arith.addf %357, %359 : vector<8x128xf32>
    %361 = math.tanh %360 : vector<8x128xf32>
    %c78 = arith.constant 78 : index
    %362 = memref.load %arg1[%c78] : memref<141xf32, #tpu.memory_space<smem>>
    %363 = vector.broadcast %362 : f32 to vector<8x128xf32>
    %364 = arith.mulf %200, %363 : vector<8x128xf32>
    %c83 = arith.constant 83 : index
    %365 = memref.load %arg1[%c83] : memref<141xf32, #tpu.memory_space<smem>>
    %366 = vector.broadcast %365 : f32 to vector<8x128xf32>
    %367 = arith.mulf %223, %366 : vector<8x128xf32>
    %368 = arith.addf %364, %367 : vector<8x128xf32>
    %c88 = arith.constant 88 : index
    %369 = memref.load %arg1[%c88] : memref<141xf32, #tpu.memory_space<smem>>
    %370 = vector.broadcast %369 : f32 to vector<8x128xf32>
    %371 = arith.mulf %246, %370 : vector<8x128xf32>
    %372 = arith.addf %368, %371 : vector<8x128xf32>
    %c93 = arith.constant 93 : index
    %373 = memref.load %arg1[%c93] : memref<141xf32, #tpu.memory_space<smem>>
    %374 = vector.broadcast %373 : f32 to vector<8x128xf32>
    %375 = arith.mulf %269, %374 : vector<8x128xf32>
    %376 = arith.addf %372, %375 : vector<8x128xf32>
    %c98 = arith.constant 98 : index
    %377 = memref.load %arg1[%c98] : memref<141xf32, #tpu.memory_space<smem>>
    %378 = vector.broadcast %377 : f32 to vector<8x128xf32>
    %379 = arith.mulf %292, %378 : vector<8x128xf32>
    %380 = arith.addf %376, %379 : vector<8x128xf32>
    %c103 = arith.constant 103 : index
    %381 = memref.load %arg1[%c103] : memref<141xf32, #tpu.memory_space<smem>>
    %382 = vector.broadcast %381 : f32 to vector<8x128xf32>
    %383 = arith.addf %380, %382 : vector<8x128xf32>
    %384 = math.tanh %383 : vector<8x128xf32>
    %c79 = arith.constant 79 : index
    %385 = memref.load %arg1[%c79] : memref<141xf32, #tpu.memory_space<smem>>
    %386 = vector.broadcast %385 : f32 to vector<8x128xf32>
    %387 = arith.mulf %200, %386 : vector<8x128xf32>
    %c84 = arith.constant 84 : index
    %388 = memref.load %arg1[%c84] : memref<141xf32, #tpu.memory_space<smem>>
    %389 = vector.broadcast %388 : f32 to vector<8x128xf32>
    %390 = arith.mulf %223, %389 : vector<8x128xf32>
    %391 = arith.addf %387, %390 : vector<8x128xf32>
    %c89 = arith.constant 89 : index
    %392 = memref.load %arg1[%c89] : memref<141xf32, #tpu.memory_space<smem>>
    %393 = vector.broadcast %392 : f32 to vector<8x128xf32>
    %394 = arith.mulf %246, %393 : vector<8x128xf32>
    %395 = arith.addf %391, %394 : vector<8x128xf32>
    %c94 = arith.constant 94 : index
    %396 = memref.load %arg1[%c94] : memref<141xf32, #tpu.memory_space<smem>>
    %397 = vector.broadcast %396 : f32 to vector<8x128xf32>
    %398 = arith.mulf %269, %397 : vector<8x128xf32>
    %399 = arith.addf %395, %398 : vector<8x128xf32>
    %c99 = arith.constant 99 : index
    %400 = memref.load %arg1[%c99] : memref<141xf32, #tpu.memory_space<smem>>
    %401 = vector.broadcast %400 : f32 to vector<8x128xf32>
    %402 = arith.mulf %292, %401 : vector<8x128xf32>
    %403 = arith.addf %399, %402 : vector<8x128xf32>
    %c104 = arith.constant 104 : index
    %404 = memref.load %arg1[%c104] : memref<141xf32, #tpu.memory_space<smem>>
    %405 = vector.broadcast %404 : f32 to vector<8x128xf32>
    %406 = arith.addf %403, %405 : vector<8x128xf32>
    %407 = math.tanh %406 : vector<8x128xf32>
    %c105 = arith.constant 105 : index
    %408 = memref.load %arg1[%c105] : memref<141xf32, #tpu.memory_space<smem>>
    %409 = vector.broadcast %408 : f32 to vector<8x128xf32>
    %410 = arith.mulf %315, %409 : vector<8x128xf32>
    %c110 = arith.constant 110 : index
    %411 = memref.load %arg1[%c110] : memref<141xf32, #tpu.memory_space<smem>>
    %412 = vector.broadcast %411 : f32 to vector<8x128xf32>
    %413 = arith.mulf %338, %412 : vector<8x128xf32>
    %414 = arith.addf %410, %413 : vector<8x128xf32>
    %c115 = arith.constant 115 : index
    %415 = memref.load %arg1[%c115] : memref<141xf32, #tpu.memory_space<smem>>
    %416 = vector.broadcast %415 : f32 to vector<8x128xf32>
    %417 = arith.mulf %361, %416 : vector<8x128xf32>
    %418 = arith.addf %414, %417 : vector<8x128xf32>
    %c120 = arith.constant 120 : index
    %419 = memref.load %arg1[%c120] : memref<141xf32, #tpu.memory_space<smem>>
    %420 = vector.broadcast %419 : f32 to vector<8x128xf32>
    %421 = arith.mulf %384, %420 : vector<8x128xf32>
    %422 = arith.addf %418, %421 : vector<8x128xf32>
    %c125 = arith.constant 125 : index
    %423 = memref.load %arg1[%c125] : memref<141xf32, #tpu.memory_space<smem>>
    %424 = vector.broadcast %423 : f32 to vector<8x128xf32>
    %425 = arith.mulf %407, %424 : vector<8x128xf32>
    %426 = arith.addf %422, %425 : vector<8x128xf32>
    %c130 = arith.constant 130 : index
    %427 = memref.load %arg1[%c130] : memref<141xf32, #tpu.memory_space<smem>>
    %428 = vector.broadcast %427 : f32 to vector<8x128xf32>
    %429 = arith.addf %426, %428 : vector<8x128xf32>
    %430 = math.tanh %429 : vector<8x128xf32>
    %c106 = arith.constant 106 : index
    %431 = memref.load %arg1[%c106] : memref<141xf32, #tpu.memory_space<smem>>
    %432 = vector.broadcast %431 : f32 to vector<8x128xf32>
    %433 = arith.mulf %315, %432 : vector<8x128xf32>
    %c111 = arith.constant 111 : index
    %434 = memref.load %arg1[%c111] : memref<141xf32, #tpu.memory_space<smem>>
    %435 = vector.broadcast %434 : f32 to vector<8x128xf32>
    %436 = arith.mulf %338, %435 : vector<8x128xf32>
    %437 = arith.addf %433, %436 : vector<8x128xf32>
    %c116 = arith.constant 116 : index
    %438 = memref.load %arg1[%c116] : memref<141xf32, #tpu.memory_space<smem>>
    %439 = vector.broadcast %438 : f32 to vector<8x128xf32>
    %440 = arith.mulf %361, %439 : vector<8x128xf32>
    %441 = arith.addf %437, %440 : vector<8x128xf32>
    %c121 = arith.constant 121 : index
    %442 = memref.load %arg1[%c121] : memref<141xf32, #tpu.memory_space<smem>>
    %443 = vector.broadcast %442 : f32 to vector<8x128xf32>
    %444 = arith.mulf %384, %443 : vector<8x128xf32>
    %445 = arith.addf %441, %444 : vector<8x128xf32>
    %c126 = arith.constant 126 : index
    %446 = memref.load %arg1[%c126] : memref<141xf32, #tpu.memory_space<smem>>
    %447 = vector.broadcast %446 : f32 to vector<8x128xf32>
    %448 = arith.mulf %407, %447 : vector<8x128xf32>
    %449 = arith.addf %445, %448 : vector<8x128xf32>
    %c131 = arith.constant 131 : index
    %450 = memref.load %arg1[%c131] : memref<141xf32, #tpu.memory_space<smem>>
    %451 = vector.broadcast %450 : f32 to vector<8x128xf32>
    %452 = arith.addf %449, %451 : vector<8x128xf32>
    %453 = math.tanh %452 : vector<8x128xf32>
    %c107 = arith.constant 107 : index
    %454 = memref.load %arg1[%c107] : memref<141xf32, #tpu.memory_space<smem>>
    %455 = vector.broadcast %454 : f32 to vector<8x128xf32>
    %456 = arith.mulf %315, %455 : vector<8x128xf32>
    %c112 = arith.constant 112 : index
    %457 = memref.load %arg1[%c112] : memref<141xf32, #tpu.memory_space<smem>>
    %458 = vector.broadcast %457 : f32 to vector<8x128xf32>
    %459 = arith.mulf %338, %458 : vector<8x128xf32>
    %460 = arith.addf %456, %459 : vector<8x128xf32>
    %c117 = arith.constant 117 : index
    %461 = memref.load %arg1[%c117] : memref<141xf32, #tpu.memory_space<smem>>
    %462 = vector.broadcast %461 : f32 to vector<8x128xf32>
    %463 = arith.mulf %361, %462 : vector<8x128xf32>
    %464 = arith.addf %460, %463 : vector<8x128xf32>
    %c122 = arith.constant 122 : index
    %465 = memref.load %arg1[%c122] : memref<141xf32, #tpu.memory_space<smem>>
    %466 = vector.broadcast %465 : f32 to vector<8x128xf32>
    %467 = arith.mulf %384, %466 : vector<8x128xf32>
    %468 = arith.addf %464, %467 : vector<8x128xf32>
    %c127 = arith.constant 127 : index
    %469 = memref.load %arg1[%c127] : memref<141xf32, #tpu.memory_space<smem>>
    %470 = vector.broadcast %469 : f32 to vector<8x128xf32>
    %471 = arith.mulf %407, %470 : vector<8x128xf32>
    %472 = arith.addf %468, %471 : vector<8x128xf32>
    %c132 = arith.constant 132 : index
    %473 = memref.load %arg1[%c132] : memref<141xf32, #tpu.memory_space<smem>>
    %474 = vector.broadcast %473 : f32 to vector<8x128xf32>
    %475 = arith.addf %472, %474 : vector<8x128xf32>
    %476 = math.tanh %475 : vector<8x128xf32>
    %c108 = arith.constant 108 : index
    %477 = memref.load %arg1[%c108] : memref<141xf32, #tpu.memory_space<smem>>
    %478 = vector.broadcast %477 : f32 to vector<8x128xf32>
    %479 = arith.mulf %315, %478 : vector<8x128xf32>
    %c113 = arith.constant 113 : index
    %480 = memref.load %arg1[%c113] : memref<141xf32, #tpu.memory_space<smem>>
    %481 = vector.broadcast %480 : f32 to vector<8x128xf32>
    %482 = arith.mulf %338, %481 : vector<8x128xf32>
    %483 = arith.addf %479, %482 : vector<8x128xf32>
    %c118 = arith.constant 118 : index
    %484 = memref.load %arg1[%c118] : memref<141xf32, #tpu.memory_space<smem>>
    %485 = vector.broadcast %484 : f32 to vector<8x128xf32>
    %486 = arith.mulf %361, %485 : vector<8x128xf32>
    %487 = arith.addf %483, %486 : vector<8x128xf32>
    %c123 = arith.constant 123 : index
    %488 = memref.load %arg1[%c123] : memref<141xf32, #tpu.memory_space<smem>>
    %489 = vector.broadcast %488 : f32 to vector<8x128xf32>
    %490 = arith.mulf %384, %489 : vector<8x128xf32>
    %491 = arith.addf %487, %490 : vector<8x128xf32>
    %c128 = arith.constant 128 : index
    %492 = memref.load %arg1[%c128] : memref<141xf32, #tpu.memory_space<smem>>
    %493 = vector.broadcast %492 : f32 to vector<8x128xf32>
    %494 = arith.mulf %407, %493 : vector<8x128xf32>
    %495 = arith.addf %491, %494 : vector<8x128xf32>
    %c133 = arith.constant 133 : index
    %496 = memref.load %arg1[%c133] : memref<141xf32, #tpu.memory_space<smem>>
    %497 = vector.broadcast %496 : f32 to vector<8x128xf32>
    %498 = arith.addf %495, %497 : vector<8x128xf32>
    %499 = math.tanh %498 : vector<8x128xf32>
    %c109 = arith.constant 109 : index
    %500 = memref.load %arg1[%c109] : memref<141xf32, #tpu.memory_space<smem>>
    %501 = vector.broadcast %500 : f32 to vector<8x128xf32>
    %502 = arith.mulf %315, %501 : vector<8x128xf32>
    %c114 = arith.constant 114 : index
    %503 = memref.load %arg1[%c114] : memref<141xf32, #tpu.memory_space<smem>>
    %504 = vector.broadcast %503 : f32 to vector<8x128xf32>
    %505 = arith.mulf %338, %504 : vector<8x128xf32>
    %506 = arith.addf %502, %505 : vector<8x128xf32>
    %c119 = arith.constant 119 : index
    %507 = memref.load %arg1[%c119] : memref<141xf32, #tpu.memory_space<smem>>
    %508 = vector.broadcast %507 : f32 to vector<8x128xf32>
    %509 = arith.mulf %361, %508 : vector<8x128xf32>
    %510 = arith.addf %506, %509 : vector<8x128xf32>
    %c124 = arith.constant 124 : index
    %511 = memref.load %arg1[%c124] : memref<141xf32, #tpu.memory_space<smem>>
    %512 = vector.broadcast %511 : f32 to vector<8x128xf32>
    %513 = arith.mulf %384, %512 : vector<8x128xf32>
    %514 = arith.addf %510, %513 : vector<8x128xf32>
    %c129 = arith.constant 129 : index
    %515 = memref.load %arg1[%c129] : memref<141xf32, #tpu.memory_space<smem>>
    %516 = vector.broadcast %515 : f32 to vector<8x128xf32>
    %517 = arith.mulf %407, %516 : vector<8x128xf32>
    %518 = arith.addf %514, %517 : vector<8x128xf32>
    %c134 = arith.constant 134 : index
    %519 = memref.load %arg1[%c134] : memref<141xf32, #tpu.memory_space<smem>>
    %520 = vector.broadcast %519 : f32 to vector<8x128xf32>
    %521 = arith.addf %518, %520 : vector<8x128xf32>
    %522 = math.tanh %521 : vector<8x128xf32>
    %c135 = arith.constant 135 : index
    %523 = memref.load %arg1[%c135] : memref<141xf32, #tpu.memory_space<smem>>
    %524 = vector.broadcast %523 : f32 to vector<8x128xf32>
    %525 = arith.mulf %430, %524 : vector<8x128xf32>
    %c136 = arith.constant 136 : index
    %526 = memref.load %arg1[%c136] : memref<141xf32, #tpu.memory_space<smem>>
    %527 = vector.broadcast %526 : f32 to vector<8x128xf32>
    %528 = arith.mulf %453, %527 : vector<8x128xf32>
    %529 = arith.addf %525, %528 : vector<8x128xf32>
    %c137 = arith.constant 137 : index
    %530 = memref.load %arg1[%c137] : memref<141xf32, #tpu.memory_space<smem>>
    %531 = vector.broadcast %530 : f32 to vector<8x128xf32>
    %532 = arith.mulf %476, %531 : vector<8x128xf32>
    %533 = arith.addf %529, %532 : vector<8x128xf32>
    %c138 = arith.constant 138 : index
    %534 = memref.load %arg1[%c138] : memref<141xf32, #tpu.memory_space<smem>>
    %535 = vector.broadcast %534 : f32 to vector<8x128xf32>
    %536 = arith.mulf %499, %535 : vector<8x128xf32>
    %537 = arith.addf %533, %536 : vector<8x128xf32>
    %c139 = arith.constant 139 : index
    %538 = memref.load %arg1[%c139] : memref<141xf32, #tpu.memory_space<smem>>
    %539 = vector.broadcast %538 : f32 to vector<8x128xf32>
    %540 = arith.mulf %522, %539 : vector<8x128xf32>
    %541 = arith.addf %537, %540 : vector<8x128xf32>
    %c140 = arith.constant 140 : index
    %542 = memref.load %arg1[%c140] : memref<141xf32, #tpu.memory_space<smem>>
    %543 = vector.broadcast %542 : f32 to vector<8x128xf32>
    %544 = arith.addf %541, %543 : vector<8x128xf32>
    %545 = arith.index_cast %1 : i32 to index
    %c0_4 = arith.constant 0 : index
    %546 = vector.load %arg3[%545, %c0_4] : memref<8x128xf32, #tpu.memory_space<vmem>>, vector<8x128xf32>
    tpu.vector_store %arg3[%545, %c0_4], %544 {strides = array<i32>} : memref<8x128xf32, #tpu.memory_space<vmem>>, vector<8x128xf32>,
    %c1_i32 = arith.constant 1 : i32
    return
  }
  func.func @transform_0(%arg0: i32, %arg1: memref<141xf32, #tpu.memory_space<smem>>) -> (i32, i32, i32) {
    %c0_i32 = arith.constant 0 : i32
    %c0_i32_0 = arith.constant 0 : i32
    %c0_i32_1 = arith.constant 0 : i32
    return %c0_i32, %arg0, %c0_i32_0 : i32, i32, i32
  }
  func.func @transform_1(%arg0: i32, %arg1: memref<141xf32, #tpu.memory_space<smem>>) -> (i32, i32) {
    %c0_i32 = arith.constant 0 : i32
    %c0_i32_0 = arith.constant 0 : i32
    return %arg0, %c0_i32 : i32, i32
  }
}

</mosaic_0001>

<llo_original>
// kernel: tpu_custom_call.1
$region0: #{tpu_custom_call.1}
  #allocation0 [shape = 'u32[]', space=smem, size = 0x4, offset = 0x4, fixed_abs, tag = 'smem constant byte address 0x4 - core index']
  #allocation1 [shape = 'u32[144,128]{1,0:T(1,128)}', space=vmem, size = 0x12000, scoped, tag = 'internal scratch']
  #allocation2 [shape = 's32[1]{0}', space=sflag, size = 0x4, scoped, tag = 'scoped memory for tpu_custom_call.1']
  #allocation3 [shape = 'u8[1024]{0}', space=smem, size = 0x400, scoped, tag = 'prefetched SMEM operand 0']
  %s0 = inlined_call_operand.hbm [shape: f32[141], index: 0, kind: input, shape index: {}]
  %s1 = inlined_call_operand.hbm [shape: f32[2,8,128], index: 1, kind: input, shape index: {}]
  %s2 = inlined_call_operand.hbm [shape: f32[8,128], index: 2, kind: output, shape index: {}]
  %s3 = sld [smem:[#allocation0]]
  $region18: #{tpu_custom_call.1} parent=0
    _
  %s5 = ssub.s32 1, %s3
  %s6 = scalar_select 0, %s5, %s3
  %8 = dma.hbm_to_smem %s0, 32, [#allocation3], [#allocation2]
  %9 = dma.done [#allocation2], 32
  %10 = sfence
  $region1: #{tpu_custom_call.1} parent=0
    #allocation4 [shape = 'u8[8192]{0}', space=vmem, size = 0x2000, scoped, tag = 'input window, operand 1, single buffered']
    #allocation5 [shape = 's32[1]{0}', space=sflag, size = 0x4, scoped, tag = 'scoped memory for tpu_custom_call.1']
    #allocation6 [shape = 's32[1]{0}', space=sflag, size = 0x4, scoped, tag = 'scoped memory for tpu_custom_call.1']
    #allocation7 [shape = 'u8[4096]{0}', space=vmem, size = 0x1000, scoped, tag = 'output window, operand 0, single buffered']
    %11 = vsyncpa [#allocation5], 0
    %12 = vsyncpa [#allocation6], 0
    // Predicated region
    $region2: #{tpu_custom_call.1} parent=1 // pred_check
      _
    $region3: #{tpu_custom_call.1} parent=1 // pred_check_branch
      %14 = sbr.rel (0) target = $region5
    $region4: #{tpu_custom_call.1} parent=1 // pred_region
      %s16 = ssub.s32 256, 256
      %17 = vsyncadd [#allocation5], %s16
      %s18 = sshll.u32 [#allocation4], 4
      %s19 = int_to_ptr.vmem [resolvable:$true] %s18
      %24 = dma.hbm_to_vmem [thread:$0]  %s1, 256, %s19, [#allocation5], 128, 128, 8
    $region5: #{tpu_custom_call.1} parent=1 // pred_fallthru
      _
    // Predicated region
    $region6: #{tpu_custom_call.1} parent=1 // pred_check
      _
    $region7: #{tpu_custom_call.1} parent=1 // pred_check_branch
      %26 = sbr.rel (0) target = $region9
    $region8: #{tpu_custom_call.1} parent=1 // pred_region
      %27 = dma.done [#allocation5], 256
    $region9: #{tpu_custom_call.1} parent=1 // pred_fallthru
      _
    %v28 = vld [vmem:[#allocation4] sm:$0xff]
    %s29 = sadd.s32 0, 8
    %s30 = scalar_lea.vmem [#allocation4], %s29
    %v31 = vld [vmem:[%s30] sm:$0xff]
    %s32 = sld [smem:[#allocation3]]
    %v33 = vstv %s32
    %v34 = vmul.f32 %v28, %v33
    %s35 = sld [smem:[#allocation3 + $0x5]]
    %v36 = vstv %s35
    %v37 = vmul.f32 %v31, %v36
    %v38 = vadd.f32 %v34, %v37
    %s39 = sld [smem:[#allocation3 + $0xa]]
    %v40 = vstv %s39
    %v41 = vadd.f32 %v38, %v40
    %v42 = vtanh.pop %v41
    %s43 = sld [smem:[#allocation3 + $0x1]]
    %v44 = vstv %s43
    %v45 = vmul.f32 %v28, %v44
    %s46 = sld [smem:[#allocation3 + $0x6]]
    %v47 = vstv %s46
    %v48 = vmul.f32 %v31, %v47
    %v49 = vadd.f32 %v45, %v48
    %s50 = sld [smem:[#allocation3 + $0xb]]
    %v51 = vstv %s50
    %v52 = vadd.f32 %v49, %v51
    %v53 = vtanh.pop %v52
    %s54 = sld [smem:[#allocation3 + $0x2]]
    %v55 = vstv %s54
    %v56 = vmul.f32 %v28, %v55
    %s57 = sld [smem:[#allocation3 + $0x7]]
    %v58 = vstv %s57
    %v59 = vmul.f32 %v31, %v58
    %v60 = vadd.f32 %v56, %v59
    %s61 = sld [smem:[#allocation3 + $0xc]]
    %v62 = vstv %s61
    %v63 = vadd.f32 %v60, %v62
    %v64 = vtanh.pop %v63
    %s65 = sld [smem:[#allocation3 + $0x3]]
    %v66 = vstv %s65
    %v67 = vmul.f32 %v28, %v66
    %s68 = sld [smem:[#allocation3 + $0x8]]
    %v69 = vstv %s68
    %v70 = vmul.f32 %v31, %v69
    %v71 = vadd.f32 %v67, %v70
    %s72 = sld [smem:[#allocation3 + $0xd]]
    %v73 = vstv %s72
    %v74 = vadd.f32 %v71, %v73
    %v75 = vtanh.pop %v74
    %s76 = sld [smem:[#allocation3 + $0x4]]
    %v77 = vstv %s76
    %v78 = vmul.f32 %v28, %v77
    %s79 = sld [smem:[#allocation3 + $0x9]]
    %v80 = vstv %s79
    %v81 = vmul.f32 %v31, %v80
    %v82 = vadd.f32 %v78, %v81
    %s83 = sld [smem:[#allocation3 + $0xe]]
    %v84 = vstv %s83
    %v85 = vadd.f32 %v82, %v84
    %v86 = vtanh.pop %v85
    %s87 = sld [smem:[#allocation3 + $0xf]]
    %v88 = vstv %s87
    %v89 = vmul.f32 %v42, %v88
    %s90 = sld [smem:[#allocation3 + $0x14]]
    %v91 = vstv %s90
    %v92 = vmul.f32 %v53, %v91
    %v93 = vadd.f32 %v89, %v92
    %s94 = sld [smem:[#allocation3 + $0x19]]
    %v95 = vstv %s94
    %v96 = vmul.f32 %v64, %v95
    %v97 = vadd.f32 %v93, %v96
    %s98 = sld [smem:[#allocation3 + $0x1e]]
    %v99 = vstv %s98
    %v100 = vmul.f32 %v75, %v99
    %v101 = vadd.f32 %v97, %v100
    %s102 = sld [smem:[#allocation3 + $0x23]]
    %v103 = vstv %s102
    %v104 = vmul.f32 %v86, %v103
    %v105 = vadd.f32 %v101, %v104
    %s106 = sld [smem:[#allocation3 + $0x28]]
    %v107 = vstv %s106
    %v108 = vadd.f32 %v105, %v107
    %v109 = vtanh.pop %v108
    %s110 = sld [smem:[#allocation3 + $0x10]]
    %v111 = vstv %s110
    %v112 = vmul.f32 %v42, %v111
    %s113 = sld [smem:[#allocation3 + $0x15]]
    %v114 = vstv %s113
    %v115 = vmul.f32 %v53, %v114
    %v116 = vadd.f32 %v112, %v115
    %s117 = sld [smem:[#allocation3 + $0x1a]]
    %v118 = vstv %s117
    %v119 = vmul.f32 %v64, %v118
    %v120 = vadd.f32 %v116, %v119
    %s121 = sld [smem:[#allocation3 + $0x1f]]
    %v122 = vstv %s121
    %v123 = vmul.f32 %v75, %v122
    %v124 = vadd.f32 %v120, %v123
    %s125 = sld [smem:[#allocation3 + $0x24]]
    %v126 = vstv %s125
    %v127 = vmul.f32 %v86, %v126
    %v128 = vadd.f32 %v124, %v127
    %s129 = sld [smem:[#allocation3 + $0x29]]
    %v130 = vstv %s129
    %v131 = vadd.f32 %v128, %v130
    %v132 = vtanh.pop %v131
    %s133 = sld [smem:[#allocation3 + $0x11]]
    %v134 = vstv %s133
    %v135 = vmul.f32 %v42, %v134
    %s136 = sld [smem:[#allocation3 + $0x16]]
    %v137 = vstv %s136
    %v138 = vmul.f32 %v53, %v137
    %v139 = vadd.f32 %v135, %v138
    %s140 = sld [smem:[#allocation3 + $0x1b]]
    %v141 = vstv %s140
    %v142 = vmul.f32 %v64, %v141
    %v143 = vadd.f32 %v139, %v142
    %s144 = sld [smem:[#allocation3 + $0x20]]
    %v145 = vstv %s144
    %v146 = vmul.f32 %v75, %v145
    %v147 = vadd.f32 %v143, %v146
    %s148 = sld [smem:[#allocation3 + $0x25]]
    %v149 = vstv %s148
    %v150 = vmul.f32 %v86, %v149
    %v151 = vadd.f32 %v147, %v150
    %s152 = sld [smem:[#allocation3 + $0x2a]]
    %v153 = vstv %s152
    %v154 = vadd.f32 %v151, %v153
    %v155 = vtanh.pop %v154
    %s156 = sld [smem:[#allocation3 + $0x12]]
    %v157 = vstv %s156
    %v158 = vmul.f32 %v42, %v157
    %s159 = sld [smem:[#allocation3 + $0x17]]
    %v160 = vstv %s159
    %v161 = vmul.f32 %v53, %v160
    %v162 = vadd.f32 %v158, %v161
    %s163 = sld [smem:[#allocation3 + $0x1c]]
    %v164 = vstv %s163
    %v165 = vmul.f32 %v64, %v164
    %v166 = vadd.f32 %v162, %v165
    %s167 = sld [smem:[#allocation3 + $0x21]]
    %v168 = vstv %s167
    %v169 = vmul.f32 %v75, %v168
    %v170 = vadd.f32 %v166, %v169
    %s171 = sld [smem:[#allocation3 + $0x26]]
    %v172 = vstv %s171
    %v173 = vmul.f32 %v86, %v172
    %v174 = vadd.f32 %v170, %v173
    %s175 = sld [smem:[#allocation3 + $0x2b]]
    %v176 = vstv %s175
    %v177 = vadd.f32 %v174, %v176
    %v178 = vtanh.pop %v177
    %s179 = sld [smem:[#allocation3 + $0x13]]
    %v180 = vstv %s179
    %v181 = vmul.f32 %v42, %v180
    %s182 = sld [smem:[#allocation3 + $0x18]]
    %v183 = vstv %s182
    %v184 = vmul.f32 %v53, %v183
    %v185 = vadd.f32 %v181, %v184
    %s186 = sld [smem:[#allocation3 + $0x1d]]
    %v187 = vstv %s186
    %v188 = vmul.f32 %v64, %v187
    %v189 = vadd.f32 %v185, %v188
    %s190 = sld [smem:[#allocation3 + $0x22]]
    %v191 = vstv %s190
    %v192 = vmul.f32 %v75, %v191
    %v193 = vadd.f32 %v189, %v192
    %s194 = sld [smem:[#allocation3 + $0x27]]
    %v195 = vstv %s194
    %v196 = vmul.f32 %v86, %v195
    %v197 = vadd.f32 %v193, %v196
    %s198 = sld [smem:[#allocation3 + $0x2c]]
    %v199 = vstv %s198
    %v200 = vadd.f32 %v197, %v199
    %v201 = vtanh.pop %v200
    %s202 = sld [smem:[#allocation3 + $0x2d]]
    %v203 = vstv %s202
    %v204 = vmul.f32 %v109, %v203
    %s205 = sld [smem:[#allocation3 + $0x32]]
    %v206 = vstv %s205
    %v207 = vmul.f32 %v132, %v206
    %v208 = vadd.f32 %v204, %v207
    %s209 = sld [smem:[#allocation3 + $0x37]]
    %v210 = vstv %s209
    %v211 = vmul.f32 %v155, %v210
    %v212 = vadd.f32 %v208, %v211
    %s213 = sld [smem:[#allocation3 + $0x3c]]
    %v214 = vstv %s213
    %v215 = vmul.f32 %v178, %v214
    %v216 = vadd.f32 %v212, %v215
    %s217 = sld [smem:[#allocation3 + $0x41]]
    %v218 = vstv %s217
    %v219 = vmul.f32 %v201, %v218
    %v220 = vadd.f32 %v216, %v219
    %s221 = sld [smem:[#allocation3 + $0x46]]
    %v222 = vstv %s221
    %v223 = vadd.f32 %v220, %v222
    %v224 = vtanh.pop %v223
    %s225 = sld [smem:[#allocation3 + $0x2e]]
    %v226 = vstv %s225
    %v227 = vmul.f32 %v109, %v226
    %s228 = sld [smem:[#allocation3 + $0x33]]
    %v229 = vstv %s228
    %v230 = vmul.f32 %v132, %v229
    %v231 = vadd.f32 %v227, %v230
    %s232 = sld [smem:[#allocation3 + $0x38]]
    %v233 = vstv %s232
    %v234 = vmul.f32 %v155, %v233
    %v235 = vadd.f32 %v231, %v234
    %s236 = sld [smem:[#allocation3 + $0x3d]]
    %v237 = vstv %s236
    %v238 = vmul.f32 %v178, %v237
    %v239 = vadd.f32 %v235, %v238
    %s240 = sld [smem:[#allocation3 + $0x42]]
    %v241 = vstv %s240
    %v242 = vmul.f32 %v201, %v241
    %v243 = vadd.f32 %v239, %v242
    %s244 = sld [smem:[#allocation3 + $0x47]]
    %v245 = vstv %s244
    %v246 = vadd.f32 %v243, %v245
    %v247 = vtanh.pop %v246
    %s248 = sld [smem:[#allocation3 + $0x2f]]
    %v249 = vstv %s248
    %v250 = vmul.f32 %v109, %v249
    %s251 = sld [smem:[#allocation3 + $0x34]]
    %v252 = vstv %s251
    %v253 = vmul.f32 %v132, %v252
    %v254 = vadd.f32 %v250, %v253
    %s255 = sld [smem:[#allocation3 + $0x39]]
    %v256 = vstv %s255
    %v257 = vmul.f32 %v155, %v256
    %v258 = vadd.f32 %v254, %v257
    %s259 = sld [smem:[#allocation3 + $0x3e]]
    %v260 = vstv %s259
    %v261 = vmul.f32 %v178, %v260
    %v262 = vadd.f32 %v258, %v261
    %s263 = sld [smem:[#allocation3 + $0x43]]
    %v264 = vstv %s263
    %v265 = vmul.f32 %v201, %v264
    %v266 = vadd.f32 %v262, %v265
    %s267 = sld [smem:[#allocation3 + $0x48]]
    %v268 = vstv %s267
    %v269 = vadd.f32 %v266, %v268
    %v270 = vtanh.pop %v269
    %s271 = sld [smem:[#allocation3 + $0x30]]
    %v272 = vstv %s271
    %v273 = vmul.f32 %v109, %v272
    %s274 = sld [smem:[#allocation3 + $0x35]]
    %v275 = vstv %s274
    %v276 = vmul.f32 %v132, %v275
    %v277 = vadd.f32 %v273, %v276
    %s278 = sld [smem:[#allocation3 + $0x3a]]
    %v279 = vstv %s278
    %v280 = vmul.f32 %v155, %v279
    %v281 = vadd.f32 %v277, %v280
    %s282 = sld [smem:[#allocation3 + $0x3f]]
    %v283 = vstv %s282
    %v284 = vmul.f32 %v178, %v283
    %v285 = vadd.f32 %v281, %v284
    %s286 = sld [smem:[#allocation3 + $0x44]]
    %v287 = vstv %s286
    %v288 = vmul.f32 %v201, %v287
    %v289 = vadd.f32 %v285, %v288
    %s290 = sld [smem:[#allocation3 + $0x49]]
    %v291 = vstv %s290
    %v292 = vadd.f32 %v289, %v291
    %v293 = vtanh.pop %v292
    %s294 = sld [smem:[#allocation3 + $0x31]]
    %v295 = vstv %s294
    %v296 = vmul.f32 %v109, %v295
    %s297 = sld [smem:[#allocation3 + $0x36]]
    %v298 = vstv %s297
    %v299 = vmul.f32 %v132, %v298
    %v300 = vadd.f32 %v296, %v299
    %s301 = sld [smem:[#allocation3 + $0x3b]]
    %v302 = vstv %s301
    %v303 = vmul.f32 %v155, %v302
    %v304 = vadd.f32 %v300, %v303
    %s305 = sld [smem:[#allocation3 + $0x40]]
    %v306 = vstv %s305
    %v307 = vmul.f32 %v178, %v306
    %v308 = vadd.f32 %v304, %v307
    %s309 = sld [smem:[#allocation3 + $0x45]]
    %v310 = vstv %s309
    %v311 = vmul.f32 %v201, %v310
    %v312 = vadd.f32 %v308, %v311
    %s313 = sld [smem:[#allocation3 + $0x4a]]
    %v314 = vstv %s313
    %v315 = vadd.f32 %v312, %v314
    %v316 = vtanh.pop %v315
    %s317 = sld [smem:[#allocation3 + $0x4b]]
    %v318 = vstv %s317
    %v319 = vmul.f32 %v224, %v318
    %s320 = sld [smem:[#allocation3 + $0x50]]
    %v321 = vstv %s320
    %v322 = vmul.f32 %v247, %v321
    %v323 = vadd.f32 %v319, %v322
    %s324 = sld [smem:[#allocation3 + $0x55]]
    %v325 = vstv %s324
    %v326 = vmul.f32 %v270, %v325
    %v327 = vadd.f32 %v323, %v326
    %s328 = sld [smem:[#allocation3 + $0x5a]]
    %v329 = vstv %s328
    %v330 = vmul.f32 %v293, %v329
    %v331 = vadd.f32 %v327, %v330
    %s332 = sld [smem:[#allocation3 + $0x5f]]
    %v333 = vstv %s332
    %v334 = vmul.f32 %v316, %v333
    %v335 = vadd.f32 %v331, %v334
    %s336 = sld [smem:[#allocation3 + $0x64]]
    %v337 = vstv %s336
    %v338 = vadd.f32 %v335, %v337
    %v339 = vtanh.pop %v338
    %s340 = sld [smem:[#allocation3 + $0x4c]]
    %v341 = vstv %s340
    %v342 = vmul.f32 %v224, %v341
    %s343 = sld [smem:[#allocation3 + $0x51]]
    %v344 = vstv %s343
    %v345 = vmul.f32 %v247, %v344
    %v346 = vadd.f32 %v342, %v345
    %s347 = sld [smem:[#allocation3 + $0x56]]
    %v348 = vstv %s347
    %v349 = vmul.f32 %v270, %v348
    %v350 = vadd.f32 %v346, %v349
    %s351 = sld [smem:[#allocation3 + $0x5b]]
    %v352 = vstv %s351
    %v353 = vmul.f32 %v293, %v352
    %v354 = vadd.f32 %v350, %v353
    %s355 = sld [smem:[#allocation3 + $0x60]]
    %v356 = vstv %s355
    %v357 = vmul.f32 %v316, %v356
    %v358 = vadd.f32 %v354, %v357
    %s359 = sld [smem:[#allocation3 + $0x65]]
    %v360 = vstv %s359
    %v361 = vadd.f32 %v358, %v360
    %v362 = vtanh.pop %v361
    %s363 = sld [smem:[#allocation3 + $0x4d]]
    %v364 = vstv %s363
    %v365 = vmul.f32 %v224, %v364
    %s366 = sld [smem:[#allocation3 + $0x52]]
    %v367 = vstv %s366
    %v368 = vmul.f32 %v247, %v367
    %v369 = vadd.f32 %v365, %v368
    %s370 = sld [smem:[#allocation3 + $0x57]]
    %v371 = vstv %s370
    %v372 = vmul.f32 %v270, %v371
    %v373 = vadd.f32 %v369, %v372
    %s374 = sld [smem:[#allocation3 + $0x5c]]
    %v375 = vstv %s374
    %v376 = vmul.f32 %v293, %v375
    %v377 = vadd.f32 %v373, %v376
    %s378 = sld [smem:[#allocation3 + $0x61]]
    %v379 = vstv %s378
    %v380 = vmul.f32 %v316, %v379
    %v381 = vadd.f32 %v377, %v380
    %s382 = sld [smem:[#allocation3 + $0x66]]
    %v383 = vstv %s382
    %v384 = vadd.f32 %v381, %v383
    %v385 = vtanh.pop %v384
    %s386 = sld [smem:[#allocation3 + $0x4e]]
    %v387 = vstv %s386
    %v388 = vmul.f32 %v224, %v387
    %s389 = sld [smem:[#allocation3 + $0x53]]
    %v390 = vstv %s389
    %v391 = vmul.f32 %v247, %v390
    %v392 = vadd.f32 %v388, %v391
    %s393 = sld [smem:[#allocation3 + $0x58]]
    %v394 = vstv %s393
    %v395 = vmul.f32 %v270, %v394
    %v396 = vadd.f32 %v392, %v395
    %s397 = sld [smem:[#allocation3 + $0x5d]]
    %v398 = vstv %s397
    %v399 = vmul.f32 %v293, %v398
    %v400 = vadd.f32 %v396, %v399
    %s401 = sld [smem:[#allocation3 + $0x62]]
    %v402 = vstv %s401
    %v403 = vmul.f32 %v316, %v402
    %v404 = vadd.f32 %v400, %v403
    %s405 = sld [smem:[#allocation3 + $0x67]]
    %v406 = vstv %s405
    %v407 = vadd.f32 %v404, %v406
    %v408 = vtanh.pop %v407
    %s409 = sld [smem:[#allocation3 + $0x4f]]
    %v410 = vstv %s409
    %v411 = vmul.f32 %v224, %v410
    %s412 = sld [smem:[#allocation3 + $0x54]]
    %v413 = vstv %s412
    %v414 = vmul.f32 %v247, %v413
    %v415 = vadd.f32 %v411, %v414
    %s416 = sld [smem:[#allocation3 + $0x59]]
    %v417 = vstv %s416
    %v418 = vmul.f32 %v270, %v417
    %v419 = vadd.f32 %v415, %v418
    %s420 = sld [smem:[#allocation3 + $0x5e]]
    %v421 = vstv %s420
    %v422 = vmul.f32 %v293, %v421
    %v423 = vadd.f32 %v419, %v422
    %s424 = sld [smem:[#allocation3 + $0x63]]
    %v425 = vstv %s424
    %v426 = vmul.f32 %v316, %v425
    %v427 = vadd.f32 %v423, %v426
    %s428 = sld [smem:[#allocation3 + $0x68]]
    %v429 = vstv %s428
    %v430 = vadd.f32 %v427, %v429
    %v431 = vtanh.pop %v430
    %s432 = sld [smem:[#allocation3 + $0x69]]
    %v433 = vstv %s432
    %v434 = vmul.f32 %v339, %v433
    %s435 = sld [smem:[#allocation3 + $0x6e]]
    %v436 = vstv %s435
    %v437 = vmul.f32 %v362, %v436
    %v438 = vadd.f32 %v434, %v437
    %s439 = sld [smem:[#allocation3 + $0x73]]
    %v440 = vstv %s439
    %v441 = vmul.f32 %v385, %v440
    %v442 = vadd.f32 %v438, %v441
    %s443 = sld [smem:[#allocation3 + $0x78]]
    %v444 = vstv %s443
    %v445 = vmul.f32 %v408, %v444
    %v446 = vadd.f32 %v442, %v445
    %s447 = sld [smem:[#allocation3 + $0x7d]]
    %v448 = vstv %s447
    %v449 = vmul.f32 %v431, %v448
    %v450 = vadd.f32 %v446, %v449
    %s451 = sld [smem:[#allocation3 + $0x82]]
    %v452 = vstv %s451
    %v453 = vadd.f32 %v450, %v452
    %v454 = vtanh.pop %v453
    %s455 = sld [smem:[#allocation3 + $0x6a]]
    %v456 = vstv %s455
    %v457 = vmul.f32 %v339, %v456
    %s458 = sld [smem:[#allocation3 + $0x6f]]
    %v459 = vstv %s458
    %v460 = vmul.f32 %v362, %v459
    %v461 = vadd.f32 %v457, %v460
    %s462 = sld [smem:[#allocation3 + $0x74]]
    %v463 = vstv %s462
    %v464 = vmul.f32 %v385, %v463
    %v465 = vadd.f32 %v461, %v464
    %s466 = sld [smem:[#allocation3 + $0x79]]
    %v467 = vstv %s466
    %v468 = vmul.f32 %v408, %v467
    %v469 = vadd.f32 %v465, %v468
    %s470 = sld [smem:[#allocation3 + $0x7e]]
    %v471 = vstv %s470
    %v472 = vmul.f32 %v431, %v471
    %v473 = vadd.f32 %v469, %v472
    %s474 = sld [smem:[#allocation3 + $0x83]]
    %v475 = vstv %s474
    %v476 = vadd.f32 %v473, %v475
    %v477 = vtanh.pop %v476
    %s478 = sld [smem:[#allocation3 + $0x6b]]
    %v479 = vstv %s478
    %v480 = vmul.f32 %v339, %v479
    %s481 = sld [smem:[#allocation3 + $0x70]]
    %v482 = vstv %s481
    %v483 = vmul.f32 %v362, %v482
    %v484 = vadd.f32 %v480, %v483
    %s485 = sld [smem:[#allocation3 + $0x75]]
    %v486 = vstv %s485
    %v487 = vmul.f32 %v385, %v486
    %v488 = vadd.f32 %v484, %v487
    %s489 = sld [smem:[#allocation3 + $0x7a]]
    %v490 = vstv %s489
    %v491 = vmul.f32 %v408, %v490
    %v492 = vadd.f32 %v488, %v491
    %s493 = sld [smem:[#allocation3 + $0x7f]]
    %v494 = vstv %s493
    %v495 = vmul.f32 %v431, %v494
    %v496 = vadd.f32 %v492, %v495
    %s497 = sld [smem:[#allocation3 + $0x84]]
    %v498 = vstv %s497
    %v499 = vadd.f32 %v496, %v498
    %v500 = vtanh.pop %v499
    %s501 = sld [smem:[#allocation3 + $0x6c]]
    %v502 = vstv %s501
    %v503 = vmul.f32 %v339, %v502
    %s504 = sld [smem:[#allocation3 + $0x71]]
    %v505 = vstv %s504
    %v506 = vmul.f32 %v362, %v505
    %v507 = vadd.f32 %v503, %v506
    %s508 = sld [smem:[#allocation3 + $0x76]]
    %v509 = vstv %s508
    %v510 = vmul.f32 %v385, %v509
    %v511 = vadd.f32 %v507, %v510
    %s512 = sld [smem:[#allocation3 + $0x7b]]
    %v513 = vstv %s512
    %v514 = vmul.f32 %v408, %v513
    %v515 = vadd.f32 %v511, %v514
    %s516 = sld [smem:[#allocation3 + $0x80]]
    %v517 = vstv %s516
    %v518 = vmul.f32 %v431, %v517
    %v519 = vadd.f32 %v515, %v518
    %s520 = sld [smem:[#allocation3 + $0x85]]
    %v521 = vstv %s520
    %v522 = vadd.f32 %v519, %v521
    %v523 = vtanh.pop %v522
    %s524 = sld [smem:[#allocation3 + $0x6d]]
    %v525 = vstv %s524
    %v526 = vmul.f32 %v339, %v525
    %s527 = sld [smem:[#allocation3 + $0x72]]
    %v528 = vstv %s527
    %v529 = vmul.f32 %v362, %v528
    %v530 = vadd.f32 %v526, %v529
    %s531 = sld [smem:[#allocation3 + $0x77]]
    %v532 = vstv %s531
    %v533 = vmul.f32 %v385, %v532
    %v534 = vadd.f32 %v530, %v533
    %s535 = sld [smem:[#allocation3 + $0x7c]]
    %v536 = vstv %s535
    %v537 = vmul.f32 %v408, %v536
    %v538 = vadd.f32 %v534, %v537
    %s539 = sld [smem:[#allocation3 + $0x81]]
    %v540 = vstv %s539
    %v541 = vmul.f32 %v431, %v540
    %v542 = vadd.f32 %v538, %v541
    %s543 = sld [smem:[#allocation3 + $0x86]]
    %v544 = vstv %s543
    %v545 = vadd.f32 %v542, %v544
    %v546 = vtanh.pop %v545
    %s547 = sld [smem:[#allocation3 + $0x87]]
    %v548 = vstv %s547
    %v549 = vmul.f32 %v454, %v548
    %s550 = sld [smem:[#allocation3 + $0x88]]
    %v551 = vstv %s550
    %v552 = vmul.f32 %v477, %v551
    %v553 = vadd.f32 %v549, %v552
    %s554 = sld [smem:[#allocation3 + $0x89]]
    %v555 = vstv %s554
    %v556 = vmul.f32 %v500, %v555
    %v557 = vadd.f32 %v553, %v556
    %s558 = sld [smem:[#allocation3 + $0x8a]]
    %v559 = vstv %s558
    %v560 = vmul.f32 %v523, %v559
    %v561 = vadd.f32 %v557, %v560
    %s562 = sld [smem:[#allocation3 + $0x8b]]
    %v563 = vstv %s562
    %v564 = vmul.f32 %v546, %v563
    %v565 = vadd.f32 %v561, %v564
    %s566 = sld [smem:[#allocation3 + $0x8c]]
    %v567 = vstv %s566
    %v568 = vadd.f32 %v565, %v567
    %569 = vst [vmem:[#allocation7] sm:$0xff] %v568
    // Predicated region
    $region10: #{tpu_custom_call.1} parent=1 // pred_check
      _
    $region11: #{tpu_custom_call.1} parent=1 // pred_check_branch
      %571 = sbr.rel (0) target = $region13
    $region12: #{tpu_custom_call.1} parent=1 // pred_region
      %s573 = ssub.s32 128, 128
      %574 = vsyncadd [#allocation6], %s573
      %s576 = sshll.u32 [#allocation7], 4
      %s577 = int_to_ptr.vmem [resolvable:$true] %s576
      %579 = dma.vmem_to_hbm [thread:$0]  %s577, 128, %s2, [#allocation6]
    $region13: #{tpu_custom_call.1} parent=1 // pred_fallthru
      _
    // Predicated region
    $region14: #{tpu_custom_call.1} parent=1 // pred_check
      _
    $region15: #{tpu_custom_call.1} parent=1 // pred_check_branch
      %581 = sbr.rel (0) target = $region17
    $region16: #{tpu_custom_call.1} parent=1 // pred_region
      %582 = dma.done [#allocation6], 128
    $region17: #{tpu_custom_call.1} parent=1 // pred_fallthru
      _
    %583 = vsyncpa [#allocation5], 1
    %584 = vsyncpa [#allocation6], 1

</llo_original>
